<compile_context>
chip_gen: v5e
topology: v5e:2x2
jax: 0.10.0
libtpu: 0.0.40
codegen_flags: <defaults>
</compile_context>

<pallas_src>
import functools

import jax
import jax.numpy as jnp
from jax.experimental import pallas as pl
from jax.experimental.pallas import tpu as pltpu

IN_FEATURES = 9
OUT_FEATURES = 9
HIDDEN = 64
PAD = 128  # lane-dense padded feature width for input and output


def _round_up(n, m):
    return ((n + m - 1) // m) * m


def _dqn_kernel(x_ref, w1_ref, b1_ref, wm_ref, bm_ref, w5_ref, b5_ref, o_ref):
    # x_ref: (tile_b, 128)   zero-padded input (only first 9 lanes valid)
    # w1_ref: (128, 64), b1_ref: (1, 64)
    # wm_ref: (3, 64, 64), bm_ref: (3, 1, 64)   stacked interior layers
    # w5_ref: (64, 128), b5_ref: (1, 128)       output padded to 128 lanes
    h = jnp.dot(x_ref[...], w1_ref[...], preferred_element_type=jnp.float32)
    h = jnp.maximum(h + b1_ref[...], 0.0)

    # Three interior Linear(64,64) + ReLU layers (statically unrolled).
    for i in range(3):
        h = jnp.dot(h, wm_ref[i], preferred_element_type=jnp.float32)
        h = jnp.maximum(h + bm_ref[i], 0.0)

    # Final Linear(64 -> 128-padded 9) + tanh, lane-dense store.
    h = jnp.dot(h, w5_ref[...], preferred_element_type=jnp.float32) + b5_ref[...]
    o_ref[...] = jnp.tanh(h)


@functools.partial(jax.jit, static_argnames=("block_b",))
def dqn_forward(x, params, *, block_b=256):
    """x: (B, 9) float32. params: list of 5 (W_t, b) with W_t shaped (in, out).

    Computes exactly the PyTorch forward: four Linear+ReLU layers then a
    Linear followed by tanh. Returns (B, 9) float32.
    """
    B = x.shape[0]
    (w1, b1), (w2, b2), (w3, b3), (w4, b4), (w5, b5) = params

    # --- host-side padding / packing (all static shapes) ---
    tile_b = min(block_b, _round_up(B, 8))
    b_pad = _round_up(B, tile_b)

    x_pad = jnp.pad(x.astype(jnp.float32),
                    ((0, b_pad - B), (0, PAD - IN_FEATURES)))

    # First layer: pad K from 9 -> 128 with zero rows (zero input lanes too).
    w1_pad = jnp.pad(w1, ((0, PAD - IN_FEATURES), (0, 0)))          # (128, 64)
    b1_2d = b1.reshape(1, HIDDEN)                                   # (1, 64)

    # Interior layers stacked.
    wm = jnp.stack([w2, w3, w4], axis=0)                            # (3, 64, 64)
    bm = jnp.stack([b2.reshape(1, HIDDEN),
                    b3.reshape(1, HIDDEN),
                    b4.reshape(1, HIDDEN)], axis=0)                 # (3, 1, 64)

    # Last layer: pad N from 9 -> 128 with zero columns (lane-dense output).
    w5_pad = jnp.pad(w5, ((0, 0), (0, PAD - OUT_FEATURES)))         # (64, 128)
    b5_pad = jnp.pad(b5.reshape(1, OUT_FEATURES),
                     ((0, 0), (0, PAD - OUT_FEATURES)))             # (1, 128)

    grid = (b_pad // tile_b,)

    flops_per_row = 2 * (PAD * HIDDEN + 3 * HIDDEN * HIDDEN + HIDDEN * PAD)
    cost = pl.CostEstimate(
        flops=b_pad * flops_per_row,
        transcendentals=b_pad * PAD,  # tanh
        bytes_accessed=4 * (2 * b_pad * PAD
                            + PAD * HIDDEN + 3 * HIDDEN * HIDDEN + HIDDEN * PAD),
    )

    out_pad = pl.pallas_call(
        _dqn_kernel,
        out_shape=jax.ShapeDtypeStruct((b_pad, PAD), jnp.float32),
        grid_spec=pltpu.PrefetchScalarGridSpec(
            num_scalar_prefetch=0,
            grid=grid,
            in_specs=[
                pl.BlockSpec((tile_b, PAD), lambda i: (i, 0)),        # x tile
                pl.BlockSpec((PAD, HIDDEN), lambda i: (0, 0)),        # w1 (resident)
                pl.BlockSpec((1, HIDDEN), lambda i: (0, 0)),          # b1
                pl.BlockSpec((3, HIDDEN, HIDDEN), lambda i: (0, 0, 0)),  # w2..w4
                pl.BlockSpec((3, 1, HIDDEN), lambda i: (0, 0, 0)),    # b2..b4
                pl.BlockSpec((HIDDEN, PAD), lambda i: (0, 0)),        # w5
                pl.BlockSpec((1, PAD), lambda i: (0, 0)),             # b5
            ],
            out_specs=pl.BlockSpec((tile_b, PAD), lambda i: (i, 0)),  # lane-dense out
        ),
        compiler_params=pltpu.CompilerParams(
            dimension_semantics=("parallel",),
        ),
        cost_estimate=cost,
    )(x_pad, w1_pad, b1_2d, wm, bm, w5_pad, b5_pad)

    return out_pad[:B, :OUT_FEATURES]


def init_params(key):
    """Deterministic init mimicking PyTorch Linear defaults:
    U(-1/sqrt(fan_in), 1/sqrt(fan_in)) for both weight and bias.
    Weights stored as (in, out) == PyTorch weight.T so y = x @ W_t + b."""
    dims = [(IN_FEATURES, HIDDEN), (HIDDEN, HIDDEN), (HIDDEN, HIDDEN),
            (HIDDEN, HIDDEN), (HIDDEN, OUT_FEATURES)]
    params = []
    for (fan_in, fan_out) in dims:
        key, kw, kb = jax.random.split(key, 3)
        bound = 1.0 / jnp.sqrt(jnp.float32(fan_in))
        w_t = jax.random.uniform(kw, (fan_in, fan_out), jnp.float32, -bound, bound)
        b = jax.random.uniform(kb, (fan_out,), jnp.float32, -bound, bound)
        params.append((w_t, b))
    return params


def reference_forward(x, params):
    h = x
    for i, (w_t, b) in enumerate(params):
        h = h @ w_t + b
        if i < len(params) - 1:
            h = jnp.maximum(h, 0.0)
    return jnp.tanh(h)


if __name__ == "__main__":
    key = jax.random.PRNGKey(0)
    key, kx1, kx2 = jax.random.split(key, 3)
    params = init_params(key)

    # Small batch (single grid step).
    B_small = 8
    x_small = jax.random.normal(kx1, (B_small, IN_FEATURES), jnp.float32)
    out_small = jax.block_until_ready(dqn_forward(x_small, params))
    ref_small = reference_forward(x_small, params)
    assert out_small.shape == (B_small, OUT_FEATURES), out_small.shape
    assert jnp.allclose(out_small, ref_small, atol=1e-5, rtol=1e-5), \
        "mismatch vs JAX reference (small batch)"

    # Larger batch exercising batch tiling + padding (grid of 2, tile 256).
    B_big = 300
    x_big = jax.random.normal(kx2, (B_big, IN_FEATURES), jnp.float32)
    out_big = jax.block_until_ready(dqn_forward(x_big, params))
    ref_big = reference_forward(x_big, params)
    assert out_big.shape == (B_big, OUT_FEATURES), out_big.shape
    assert jnp.allclose(out_big, ref_big, atol=1e-5, rtol=1e-5), \
        "mismatch vs JAX reference (tiled batch)"

    print("KERNEL_OK")
</pallas_src>

<mosaic_0001>
module attributes {stable_mosaic.version = 11 : i64} {
  func.func @_dqn_kernel(%arg0: i32, %arg1: memref<8x128xf32, #tpu.memory_space<vmem>>, %arg2: memref<128x64xf32, #tpu.memory_space<vmem>>, %arg3: memref<1x64xf32, #tpu.memory_space<vmem>>, %arg4: memref<3x64x64xf32, #tpu.memory_space<vmem>>, %arg5: memref<3x1x64xf32, #tpu.memory_space<vmem>>, %arg6: memref<64x128xf32, #tpu.memory_space<vmem>>, %arg7: memref<1x128xf32, #tpu.memory_space<vmem>>, %arg8: memref<8x128xf32, #tpu.memory_space<vmem>>) attributes {dimension_semantics = [#tpu.dimension_semantics<parallel>], iteration_bounds = array<i64: 1>, scalar_prefetch = 0 : i64, scratch_operands = 0 : i64, tpu.core_type = #tpu.core_type<tc>, window_params = [{transform_indices = @transform_0, window_bounds = array<i64: 8, 128>}, {pipeline_mode = #tpu.pipeline_mode<synchronous>, transform_indices = @transform_1, window_bounds = array<i64: 128, 64>}, {pipeline_mode = #tpu.pipeline_mode<synchronous>, transform_indices = @transform_2, window_bounds = array<i64: 1, 64>}, {pipeline_mode = #tpu.pipeline_mode<synchronous>, transform_indices = @transform_3, window_bounds = array<i64: 3, 64, 64>}, {pipeline_mode = #tpu.pipeline_mode<synchronous>, transform_indices = @transform_4, window_bounds = array<i64: 3, 1, 64>}, {pipeline_mode = #tpu.pipeline_mode<synchronous>, transform_indices = @transform_5, window_bounds = array<i64: 64, 128>}, {pipeline_mode = #tpu.pipeline_mode<synchronous>, transform_indices = @transform_6, window_bounds = array<i64: 1, 128>}, {transform_indices = @transform_7, window_bounds = array<i64: 8, 128>}]} {
    %c0 = arith.constant 0 : index
    %c0_0 = arith.constant 0 : index
    %0 = vector.load %arg1[%c0, %c0_0] : memref<8x128xf32, #tpu.memory_space<vmem>>, vector<8x128xf32>
    %c0_1 = arith.constant 0 : index
    %c0_2 = arith.constant 0 : index
    %1 = vector.load %arg2[%c0_1, %c0_2] : memref<128x64xf32, #tpu.memory_space<vmem>>, vector<128x64xf32>
    %cst = arith.constant dense<0.000000e+00> : vector<8x64xf32>
    %2 = tpu.matmul %0, %1, %cst {dimension_numbers = #tpu.dot_dimension_numbers<[1], [0], [0], [1], [0, 0, 1, 1], [], []>} : vector<8x128xf32>, vector<128x64xf32>, vector<8x64xf32> -> vector<8x64xf32>
    %c0_3 = arith.constant 0 : index
    %c0_4 = arith.constant 0 : index
    %3 = vector.load %arg3[%c0_3, %c0_4] : memref<1x64xf32, #tpu.memory_space<vmem>>, vector<1x64xf32>
    %4 = vector.broadcast %3 : vector<1x64xf32> to vector<8x64xf32>
    %5 = arith.addf %2, %4 : vector<8x64xf32>
    %cst_5 = arith.constant 0.000000e+00 : f32
    %6 = vector.broadcast %cst_5 : f32 to vector<8x64xf32>
    %7 = arith.maximumf %5, %6 : vector<8x64xf32>
    %c0_6 = arith.constant 0 : index
    %c0_7 = arith.constant 0 : index
    %c0_8 = arith.constant 0 : index
    %8 = vector.load %arg4[%c0_6, %c0_7, %c0_8] : memref<3x64x64xf32, #tpu.memory_space<vmem>>, vector<1x64x64xf32>
    %9 = vector.shape_cast %8 : vector<1x64x64xf32> to vector<64x64xf32>
    %cst_9 = arith.constant dense<0.000000e+00> : vector<8x64xf32>
    %10 = tpu.matmul %7, %9, %cst_9 {dimension_numbers = #tpu.dot_dimension_numbers<[1], [0], [0], [1], [0, 0, 1, 1], [], []>} : vector<8x64xf32>, vector<64x64xf32>, vector<8x64xf32> -> vector<8x64xf32>
    %c0_10 = arith.constant 0 : index
    %c0_11 = arith.constant 0 : index
    %c0_12 = arith.constant 0 : index
    %11 = vector.load %arg5[%c0_10, %c0_11, %c0_12] : memref<3x1x64xf32, #tpu.memory_space<vmem>>, vector<1x1x64xf32>
    %12 = vector.shape_cast %11 : vector<1x1x64xf32> to vector<1x64xf32>
    %13 = vector.broadcast %12 : vector<1x64xf32> to vector<8x64xf32>
    %14 = arith.addf %10, %13 : vector<8x64xf32>
    %cst_13 = arith.constant 0.000000e+00 : f32
    %15 = vector.broadcast %cst_13 : f32 to vector<8x64xf32>
    %16 = arith.maximumf %14, %15 : vector<8x64xf32>
    %c1 = arith.constant 1 : index
    %c0_14 = arith.constant 0 : index
    %c0_15 = arith.constant 0 : index
    %17 = vector.load %arg4[%c1, %c0_14, %c0_15] : memref<3x64x64xf32, #tpu.memory_space<vmem>>, vector<1x64x64xf32>
    %18 = vector.shape_cast %17 : vector<1x64x64xf32> to vector<64x64xf32>
    %cst_16 = arith.constant dense<0.000000e+00> : vector<8x64xf32>
    %19 = tpu.matmul %16, %18, %cst_16 {dimension_numbers = #tpu.dot_dimension_numbers<[1], [0], [0], [1], [0, 0, 1, 1], [], []>} : vector<8x64xf32>, vector<64x64xf32>, vector<8x64xf32> -> vector<8x64xf32>
    %c1_17 = arith.constant 1 : index
    %c0_18 = arith.constant 0 : index
    %c0_19 = arith.constant 0 : index
    %20 = vector.load %arg5[%c1_17, %c0_18, %c0_19] : memref<3x1x64xf32, #tpu.memory_space<vmem>>, vector<1x1x64xf32>
    %21 = vector.shape_cast %20 : vector<1x1x64xf32> to vector<1x64xf32>
    %22 = vector.broadcast %21 : vector<1x64xf32> to vector<8x64xf32>
    %23 = arith.addf %19, %22 : vector<8x64xf32>
    %cst_20 = arith.constant 0.000000e+00 : f32
    %24 = vector.broadcast %cst_20 : f32 to vector<8x64xf32>
    %25 = arith.maximumf %23, %24 : vector<8x64xf32>
    %c2 = arith.constant 2 : index
    %c0_21 = arith.constant 0 : index
    %c0_22 = arith.constant 0 : index
    %26 = vector.load %arg4[%c2, %c0_21, %c0_22] : memref<3x64x64xf32, #tpu.memory_space<vmem>>, vector<1x64x64xf32>
    %27 = vector.shape_cast %26 : vector<1x64x64xf32> to vector<64x64xf32>
    %cst_23 = arith.constant dense<0.000000e+00> : vector<8x64xf32>
    %28 = tpu.matmul %25, %27, %cst_23 {dimension_numbers = #tpu.dot_dimension_numbers<[1], [0], [0], [1], [0, 0, 1, 1], [], []>} : vector<8x64xf32>, vector<64x64xf32>, vector<8x64xf32> -> vector<8x64xf32>
    %c2_24 = arith.constant 2 : index
    %c0_25 = arith.constant 0 : index
    %c0_26 = arith.constant 0 : index
    %29 = vector.load %arg5[%c2_24, %c0_25, %c0_26] : memref<3x1x64xf32, #tpu.memory_space<vmem>>, vector<1x1x64xf32>
    %30 = vector.shape_cast %29 : vector<1x1x64xf32> to vector<1x64xf32>
    %31 = vector.broadcast %30 : vector<1x64xf32> to vector<8x64xf32>
    %32 = arith.addf %28, %31 : vector<8x64xf32>
    %cst_27 = arith.constant 0.000000e+00 : f32
    %33 = vector.broadcast %cst_27 : f32 to vector<8x64xf32>
    %34 = arith.maximumf %32, %33 : vector<8x64xf32>
    %c0_28 = arith.constant 0 : index
    %c0_29 = arith.constant 0 : index
    %35 = vector.load %arg6[%c0_28, %c0_29] : memref<64x128xf32, #tpu.memory_space<vmem>>, vector<64x128xf32>
    %cst_30 = arith.constant dense<0.000000e+00> : vector<8x128xf32>
    %36 = tpu.matmul %34, %35, %cst_30 {dimension_numbers = #tpu.dot_dimension_numbers<[1], [0], [0], [1], [0, 0, 1, 1], [], []>} : vector<8x64xf32>, vector<64x128xf32>, vector<8x128xf32> -> vector<8x128xf32>
    %c0_31 = arith.constant 0 : index
    %c0_32 = arith.constant 0 : index
    %37 = vector.load %arg7[%c0_31, %c0_32] : memref<1x128xf32, #tpu.memory_space<vmem>>, vector<1x128xf32>
    %38 = vector.broadcast %37 : vector<1x128xf32> to vector<8x128xf32>
    %39 = arith.addf %36, %38 : vector<8x128xf32>
    %40 = math.tanh %39 : vector<8x128xf32>
    %c0_33 = arith.constant 0 : index
    %c0_34 = arith.constant 0 : index
    %41 = vector.load %arg8[%c0_33, %c0_34] : memref<8x128xf32, #tpu.memory_space<vmem>>, vector<8x128xf32>
    tpu.vector_store %arg8[%c0_33, %c0_34], %40 {strides = array<i32>} : memref<8x128xf32, #tpu.memory_space<vmem>>, vector<8x128xf32>,
    return
  }
  func.func @transform_0(%arg0: i32) -> (i32, i32) {
    %c0_i32 = arith.constant 0 : i32
    %c0_i32_0 = arith.constant 0 : i32
    return %arg0, %c0_i32 : i32, i32
  }
  func.func @transform_1(%arg0: i32) -> (i32, i32) {
    %c0_i32 = arith.constant 0 : i32
    %c0_i32_0 = arith.constant 0 : i32
    %c0_i32_1 = arith.constant 0 : i32
    return %c0_i32, %c0_i32_0 : i32, i32
  }
  func.func @transform_2(%arg0: i32) -> (i32, i32) {
    %c0_i32 = arith.constant 0 : i32
    %c0_i32_0 = arith.constant 0 : i32
    %c0_i32_1 = arith.constant 0 : i32
    return %c0_i32, %c0_i32_0 : i32, i32
  }
  func.func @transform_3(%arg0: i32) -> (i32, i32, i32) {
    %c0_i32 = arith.constant 0 : i32
    %c0_i32_0 = arith.constant 0 : i32
    %c0_i32_1 = arith.constant 0 : i32
    %c0_i32_2 = arith.constant 0 : i32
    return %c0_i32, %c0_i32_0, %c0_i32_1 : i32, i32, i32
  }
  func.func @transform_4(%arg0: i32) -> (i32, i32, i32) {
    %c0_i32 = arith.constant 0 : i32
    %c0_i32_0 = arith.constant 0 : i32
    %c0_i32_1 = arith.constant 0 : i32
    %c0_i32_2 = arith.constant 0 : i32
    return %c0_i32, %c0_i32_0, %c0_i32_1 : i32, i32, i32
  }
  func.func @transform_5(%arg0: i32) -> (i32, i32) {
    %c0_i32 = arith.constant 0 : i32
    %c0_i32_0 = arith.constant 0 : i32
    %c0_i32_1 = arith.constant 0 : i32
    return %c0_i32, %c0_i32_0 : i32, i32
  }
  func.func @transform_6(%arg0: i32) -> (i32, i32) {
    %c0_i32 = arith.constant 0 : i32
    %c0_i32_0 = arith.constant 0 : i32
    %c0_i32_1 = arith.constant 0 : i32
    return %c0_i32, %c0_i32_0 : i32, i32
  }
  func.func @transform_7(%arg0: i32) -> (i32, i32) {
    %c0_i32 = arith.constant 0 : i32
    %c0_i32_0 = arith.constant 0 : i32
    return %arg0, %c0_i32 : i32, i32
  }
}

</mosaic_0001>

<llo_original>
// kernel: dqn_forward.1
$region0: #{dqn_forward.1}
  #allocation0 [shape = 'u32[]', space=smem, size = 0x4, offset = 0x4, fixed_abs, tag = 'smem constant byte address 0x4 - core index']
  #allocation1 [shape = 'u32[72,128]{1,0:T(1,128)}', space=vmem, size = 0x9000, scoped, tag = 'internal scratch']
  %s0 = inlined_call_operand.vmem [shape: f32[8,128], index: 0, kind: input, shape index: {}]
  %s1 = inlined_call_operand.vmem [shape: f32[128,64], index: 1, kind: input, shape index: {}]
  %s2 = inlined_call_operand.vmem [shape: f32[1,64], index: 2, kind: input, shape index: {}]
  %s3 = inlined_call_operand.vmem [shape: f32[3,64,64], index: 3, kind: input, shape index: {}]
  %s4 = inlined_call_operand.vmem [shape: f32[3,1,64], index: 4, kind: input, shape index: {}]
  %s5 = inlined_call_operand.vmem [shape: f32[64,128], index: 5, kind: input, shape index: {}]
  %s6 = inlined_call_operand.vmem [shape: f32[1,128], index: 6, kind: input, shape index: {}]
  %s7 = inlined_call_operand.hbm [shape: f32[8,128], index: 7, kind: output, shape index: {}]
  %s8 = sld [smem:[#allocation0]]
  $region38: #{dqn_forward.1} parent=0
    _
  %s10 = ssub.s32 1, %s8
  %s11 = scalar_select 0, %s10, %s8
  $region1: #{dqn_forward.1} parent=0
    #allocation2 [shape = 'u8[4096]{0}', space=vmem, size = 0x1000, scoped, tag = 'output window, operand 0, single buffered']
    #allocation3 [shape = 's32[1]{0}', space=sflag, size = 0x4, scoped, tag = 'scoped memory for dqn_forward.1']
    %12 = vsyncpa [#allocation3], 0
    // Predicated region
    $region2: #{dqn_forward.1} parent=1 // pred_check
      _
    $region3: #{dqn_forward.1} parent=1 // pred_check_branch
      %14 = sbr.rel (0) target = $region5
    $region4: #{dqn_forward.1} parent=1 // pred_region
      _
    $region5: #{dqn_forward.1} parent=1 // pred_fallthru
      _
    // Predicated region
    $region6: #{dqn_forward.1} parent=1 // pred_check
      _
    $region7: #{dqn_forward.1} parent=1 // pred_check_branch
      %16 = sbr.rel (0) target = $region9
    $region8: #{dqn_forward.1} parent=1 // pred_region
      _
    $region9: #{dqn_forward.1} parent=1 // pred_fallthru
      _
    // Predicated region
    $region10: #{dqn_forward.1} parent=1 // pred_check
      _
    $region11: #{dqn_forward.1} parent=1 // pred_check_branch
      %18 = sbr.rel (0) target = $region13
    $region12: #{dqn_forward.1} parent=1 // pred_region
      _
    $region13: #{dqn_forward.1} parent=1 // pred_fallthru
      _
    // Predicated region
    $region14: #{dqn_forward.1} parent=1 // pred_check
      _
    $region15: #{dqn_forward.1} parent=1 // pred_check_branch
      %20 = sbr.rel (0) target = $region17
    $region16: #{dqn_forward.1} parent=1 // pred_region
      _
    $region17: #{dqn_forward.1} parent=1 // pred_fallthru
      _
    // Predicated region
    $region18: #{dqn_forward.1} parent=1 // pred_check
      _
    $region19: #{dqn_forward.1} parent=1 // pred_check_branch
      %22 = sbr.rel (0) target = $region21
    $region20: #{dqn_forward.1} parent=1 // pred_region
      _
    $region21: #{dqn_forward.1} parent=1 // pred_fallthru
      _
    // Predicated region
    $region22: #{dqn_forward.1} parent=1 // pred_check
      _
    $region23: #{dqn_forward.1} parent=1 // pred_check_branch
      %24 = sbr.rel (0) target = $region25
    $region24: #{dqn_forward.1} parent=1 // pred_region
      _
    $region25: #{dqn_forward.1} parent=1 // pred_fallthru
      _
    // Predicated region
    $region26: #{dqn_forward.1} parent=1 // pred_check
      _
    $region27: #{dqn_forward.1} parent=1 // pred_check_branch
      %26 = sbr.rel (0) target = $region29
    $region28: #{dqn_forward.1} parent=1 // pred_region
      _
    $region29: #{dqn_forward.1} parent=1 // pred_fallthru
      _
    %v27 = vld [vmem:[%s0] sm:$0xff]
    %v28 = vld [vmem:[%s1] sm:$0xff]
    %v29 = vld [vmem:[%s1 + $0x8] sm:$0xff]
    %v30 = vld [vmem:[%s1 + $0x10] sm:$0xff]
    %v31 = vld [vmem:[%s1 + $0x18] sm:$0xff]
    %v32 = vld [vmem:[%s1 + $0x20] sm:$0xff]
    %v33 = vld [vmem:[%s1 + $0x28] sm:$0xff]
    %v34 = vld [vmem:[%s1 + $0x30] sm:$0xff]
    %v35 = vld [vmem:[%s1 + $0x38] sm:$0xff]
    %v36 = vld [vmem:[%s1 + $0x40] sm:$0xff]
    %v37 = vld [vmem:[%s1 + $0x48] sm:$0xff]
    %v38 = vld [vmem:[%s1 + $0x50] sm:$0xff]
    %v39 = vld [vmem:[%s1 + $0x58] sm:$0xff]
    %v40 = vld [vmem:[%s1 + $0x60] sm:$0xff]
    %v41 = vld [vmem:[%s1 + $0x68] sm:$0xff]
    %v42 = vld [vmem:[%s1 + $0x70] sm:$0xff]
    %v43 = vld [vmem:[%s1 + $0x78] sm:$0xff]
    %v44 = vld [vmem:[%s2] sm:$0x1]
    %v46 = vperm.slane %v44, 0
    %48 = vmatpush.msra.mxu0 %v43
    %49 = vmatpush.msra.mxu0 %v42
    %50 = vmatpush.msra.mxu0 %v41
    %51 = vmatpush.msra.mxu0 %v40
    %52 = vmatpush.msra.mxu0 %v39
    %53 = vmatpush.msra.mxu0 %v38
    %54 = vmatpush.msra.mxu0 %v37
    %55 = vmatpush.msra.mxu0 %v36
    %56 = vmatpush.msra.mxu0 %v35
    %57 = vmatpush.msra.mxu0 %v34
    %58 = vmatpush.msra.mxu0 %v33
    %59 = vmatpush.msra.mxu0 %v32
    %60 = vmatpush.msra.mxu0 %v31
    %61 = vmatpush.msra.mxu0 %v30
    %62 = vmatpush.msra.mxu0 %v29
    %63 = vmatpush.msra.mxu0 %v28
    %64 = vmatmul.f32.gmra.mxu0 %v27
    %v65 = vpop.f32.mrf.mxu0
    %v66 = vadd.f32 %v46, %v65
    %67 = vdwg.mxu0
    %v68 = vmax.f32 %v66, 0.0
    %v69 = vld [vmem:[%s3] sm:$0xff]
    %v70 = vld [vmem:[%s3 + $0x8] sm:$0xff]
    %v71 = vld [vmem:[%s3 + $0x10] sm:$0xff]
    %v72 = vld [vmem:[%s3 + $0x18] sm:$0xff]
    %v73 = vld [vmem:[%s3 + $0x20] sm:$0xff]
    %v74 = vld [vmem:[%s3 + $0x28] sm:$0xff]
    %v75 = vld [vmem:[%s3 + $0x30] sm:$0xff]
    %v76 = vld [vmem:[%s3 + $0x38] sm:$0xff]
    %v77 = vld [vmem:[%s4] sm:$0x1]
    %v79 = vperm.slane %v77, 0
    %vm81 = vcmask 523264
    %v83 = vsel %vm81, %v68, 0
    %85 = vmatpush.msra.mxu0 0.0
    %86 = vmatpush.msra.mxu0 0.0
    %87 = vmatpush.msra.mxu0 0.0
    %88 = vmatpush.msra.mxu0 0.0
    %89 = vmatpush.msra.mxu0 0.0
    %90 = vmatpush.msra.mxu0 0.0
    %91 = vmatpush.msra.mxu0 0.0
    %92 = vmatpush.msra.mxu0 0.0
    %93 = vmatpush.msra.mxu0 %v76
    %94 = vmatpush.msra.mxu0 %v75
    %95 = vmatpush.msra.mxu0 %v74
    %96 = vmatpush.msra.mxu0 %v73
    %97 = vmatpush.msra.mxu0 %v72
    %98 = vmatpush.msra.mxu0 %v71
    %99 = vmatpush.msra.mxu0 %v70
    %100 = vmatpush.msra.mxu0 %v69
    %101 = vmatmul.f32.gmra.mxu0 %v83
    %v102 = vpop.f32.mrf.mxu0
    %v103 = vadd.f32 %v79, %v102
    %104 = vdwg.mxu0
    %v105 = vmax.f32 %v103, 0.0
    %s106 = scalar_lea.vmem %s3, 64
    %v107 = vld [vmem:[%s106] sm:$0xff]
    %v108 = vld [vmem:[%s106 + $0x8] sm:$0xff]
    %v109 = vld [vmem:[%s106 + $0x10] sm:$0xff]
    %v110 = vld [vmem:[%s106 + $0x18] sm:$0xff]
    %v111 = vld [vmem:[%s106 + $0x20] sm:$0xff]
    %v112 = vld [vmem:[%s106 + $0x28] sm:$0xff]
    %v113 = vld [vmem:[%s106 + $0x30] sm:$0xff]
    %v114 = vld [vmem:[%s106 + $0x38] sm:$0xff]
    %s115 = scalar_lea.vmem %s4, 1
    %v116 = vld [vmem:[%s115] sm:$0x1]
    %v118 = vperm.slane %v116, 0
    %v121 = vsel %vm81, %v105, 0
    %123 = vmatpush.msra.mxu0 0.0
    %124 = vmatpush.msra.mxu0 0.0
    %125 = vmatpush.msra.mxu0 0.0
    %126 = vmatpush.msra.mxu0 0.0
    %127 = vmatpush.msra.mxu0 0.0
    %128 = vmatpush.msra.mxu0 0.0
    %129 = vmatpush.msra.mxu0 0.0
    %130 = vmatpush.msra.mxu0 0.0
    %131 = vmatpush.msra.mxu0 %v114
    %132 = vmatpush.msra.mxu0 %v113
    %133 = vmatpush.msra.mxu0 %v112
    %134 = vmatpush.msra.mxu0 %v111
    %135 = vmatpush.msra.mxu0 %v110
    %136 = vmatpush.msra.mxu0 %v109
    %137 = vmatpush.msra.mxu0 %v108
    %138 = vmatpush.msra.mxu0 %v107
    %139 = vmatmul.f32.gmra.mxu0 %v121
    %v140 = vpop.f32.mrf.mxu0
    %v141 = vadd.f32 %v118, %v140
    %142 = vdwg.mxu0
    %v143 = vmax.f32 %v141, 0.0
    %s144 = scalar_lea.vmem %s3, 128
    %v145 = vld [vmem:[%s144] sm:$0xff]
    %v146 = vld [vmem:[%s144 + $0x8] sm:$0xff]
    %v147 = vld [vmem:[%s144 + $0x10] sm:$0xff]
    %v148 = vld [vmem:[%s144 + $0x18] sm:$0xff]
    %v149 = vld [vmem:[%s144 + $0x20] sm:$0xff]
    %v150 = vld [vmem:[%s144 + $0x28] sm:$0xff]
    %v151 = vld [vmem:[%s144 + $0x30] sm:$0xff]
    %v152 = vld [vmem:[%s144 + $0x38] sm:$0xff]
    %s153 = scalar_lea.vmem %s4, 2
    %v154 = vld [vmem:[%s153] sm:$0x1]
    %v156 = vperm.slane %v154, 0
    %v159 = vsel %vm81, %v143, 0
    %161 = vmatpush.msra.mxu0 0.0
    %162 = vmatpush.msra.mxu0 0.0
    %163 = vmatpush.msra.mxu0 0.0
    %164 = vmatpush.msra.mxu0 0.0
    %165 = vmatpush.msra.mxu0 0.0
    %166 = vmatpush.msra.mxu0 0.0
    %167 = vmatpush.msra.mxu0 0.0
    %168 = vmatpush.msra.mxu0 0.0
    %169 = vmatpush.msra.mxu0 %v152
    %170 = vmatpush.msra.mxu0 %v151
    %171 = vmatpush.msra.mxu0 %v150
    %172 = vmatpush.msra.mxu0 %v149
    %173 = vmatpush.msra.mxu0 %v148
    %174 = vmatpush.msra.mxu0 %v147
    %175 = vmatpush.msra.mxu0 %v146
    %176 = vmatpush.msra.mxu0 %v145
    %177 = vmatmul.f32.gmra.mxu0 %v159
    %v178 = vpop.f32.mrf.mxu0
    %v179 = vadd.f32 %v156, %v178
    %180 = vdwg.mxu0
    %v181 = vmax.f32 %v179, 0.0
    %v182 = vld [vmem:[%s5] sm:$0xff]
    %v183 = vld [vmem:[%s5 + $0x8] sm:$0xff]
    %v184 = vld [vmem:[%s5 + $0x10] sm:$0xff]
    %v185 = vld [vmem:[%s5 + $0x18] sm:$0xff]
    %v186 = vld [vmem:[%s5 + $0x20] sm:$0xff]
    %v187 = vld [vmem:[%s5 + $0x28] sm:$0xff]
    %v188 = vld [vmem:[%s5 + $0x30] sm:$0xff]
    %v189 = vld [vmem:[%s5 + $0x38] sm:$0xff]
    %v190 = vld [vmem:[%s6] sm:$0x1]
    %v192 = vperm.slane %v190, 0
    %v195 = vsel %vm81, %v181, 0
    %197 = vmatpush.msra.mxu0 0.0
    %198 = vmatpush.msra.mxu0 0.0
    %199 = vmatpush.msra.mxu0 0.0
    %200 = vmatpush.msra.mxu0 0.0
    %201 = vmatpush.msra.mxu0 0.0
    %202 = vmatpush.msra.mxu0 0.0
    %203 = vmatpush.msra.mxu0 0.0
    %204 = vmatpush.msra.mxu0 0.0
    %205 = vmatpush.msra.mxu0 %v189
    %206 = vmatpush.msra.mxu0 %v188
    %207 = vmatpush.msra.mxu0 %v187
    %208 = vmatpush.msra.mxu0 %v186
    %209 = vmatpush.msra.mxu0 %v185
    %210 = vmatpush.msra.mxu0 %v184
    %211 = vmatpush.msra.mxu0 %v183
    %212 = vmatpush.msra.mxu0 %v182
    %213 = vmatmul.f32.gmra.mxu0 %v195
    %v214 = vpop.f32.mrf.mxu0
    %v215 = vadd.f32 %v192, %v214
    %216 = vdwg.mxu0
    %v217 = vtanh.pop %v215
    %218 = vst [vmem:[#allocation2] sm:$0xff] %v217
    // Predicated region
    $region30: #{dqn_forward.1} parent=1 // pred_check
      _
    $region31: #{dqn_forward.1} parent=1 // pred_check_branch
      %220 = sbr.rel (0) target = $region33
    $region32: #{dqn_forward.1} parent=1 // pred_region
      %222 = vsyncadd [#allocation3], 0
      %s224 = sshll.u32 [#allocation2], 4
      %s225 = int_to_ptr.vmem [resolvable:$true] %s224
      %s226 = sshll.u32 %s7, 4
      %s227 = int_to_ptr.hbm [resolvable:$true] %s226
      %229 = dma.vmem_to_hbm [thread:$0]  %s225, 128, %s227, [#allocation3]
    $region33: #{dqn_forward.1} parent=1 // pred_fallthru
      _
    // Predicated region
    $region34: #{dqn_forward.1} parent=1 // pred_check
      _
    $region35: #{dqn_forward.1} parent=1 // pred_check_branch
      %231 = sbr.rel (0) target = $region37
    $region36: #{dqn_forward.1} parent=1 // pred_region
      %233 = dma.done [#allocation3], 128
    $region37: #{dqn_forward.1} parent=1 // pred_fallthru
      _
    %234 = vsyncpa [#allocation3], 1

</llo_original>
